<compile_context>
chip_gen: v7x
topology: tpu7x:2x2x1
jax: 0.10.0
libtpu: 0.0.40
codegen_flags: <defaults>
</compile_context>

<pallas_src>
import jax
import jax.numpy as jnp
from jax import lax
from jax.experimental import pallas as pl
from jax.experimental.pallas import tpu as pltpu

_LANES = 128
_SUBLANES = 8


def _round_up(a, b):
    return ((a + b - 1) // b) * b


def _default_num_splits():
    # 2 TensorCores per chip on v7x -> shard rows across them via the leading
    # "parallel" grid axis; single-TC chips (v5e/v6e) use 1 split.
    try:
        dev = jax.devices()[0]
        nc = getattr(dev, "num_cores", None)
        if isinstance(nc, int) and nc > 1:
            return min(int(nc), 2)
        kind = str(getattr(dev, "device_kind", "")).lower()
        if "v7" in kind:
            return 2
    except Exception:
        pass
    return 1


def _make_bce_kernel(tile_rows, acc_rows, tiles_per_split, rows_pad):
    def kernel(x_ref, p_ref, acc_ref):
        c = pl.program_id(0)          # "parallel" split (2 TCs on v7x)
        i = pl.program_id(1)          # "arbitrary" reduction over image tiles

        @pl.when(i == 0)
        def _init():
            acc_ref[...] = jnp.zeros_like(acc_ref)

        # Cast to f32 AFTER the DMA (inputs travel HBM->VMEM in native dtype).
        x = x_ref[...].astype(jnp.float32)
        p = p_ref[...].astype(jnp.float32)
        # F.binary_cross_entropy clamps log() at -100 (torch semantics). The
        # clamp must precede the multiply so zero-padded elements contribute 0.
        log_p = jnp.maximum(jnp.log(p), -100.0)
        log_1mp = jnp.maximum(jnp.log(1.0 - p), -100.0)
        t = x * log_p + (1.0 - x) * log_1mp                  # (tile_rows, 128)

        # Mask rows past the valid (already 8/128-padded) extent: covers the
        # non-dividing last tile's Pallas padding (unspecified contents) and any
        # fully out-of-range grid step whose block index was clamped below.
        row0 = (c * tiles_per_split + i) * tile_rows
        local = lax.broadcasted_iota(jnp.int32, (tile_rows, 1), 0)
        t = jnp.where(row0 + local < rows_pad, t, 0.0)

        # VPU-only partial reduction into the resident (acc_rows,128) block:
        # acc_rows=64 gives 8 independent add chains (better ILP on v7x).
        acc_ref[...] += t.reshape(tile_rows // acc_rows, acc_rows, _LANES).sum(axis=0)

    return kernel


def vae_loss(x, recon_x, mu, logvar, kl_coef=0.01, *, max_tile_rows=4096,
             num_splits=None, min_pallas_elements=256 * 1024, force_pallas=False):
    # KL term: tiny (N,Z) arrays -> plain XLA in the wrapper (review item).
    mu32 = mu.astype(jnp.float32)
    lv32 = logvar.astype(jnp.float32)
    kl = -0.5 * jnp.sum(1.0 + lv32 - mu32 * mu32 - jnp.exp(lv32))

    n = x.size
    if (not force_pallas) and n < min_pallas_elements:
        # Small-input fast path: launch + pipeline prologue dominates; fused XLA wins.
        xf = x.astype(jnp.float32)
        pf = recon_x.astype(jnp.float32)
        log_p = jnp.maximum(jnp.log(pf), -100.0)
        log_1mp = jnp.maximum(jnp.log(1.0 - pf), -100.0)
        bce = -jnp.sum(xf * log_p + (1.0 - xf) * log_1mp)
        return bce + kl_coef * kl

    rows = pl.cdiv(n, _LANES)
    rows_pad = _round_up(rows, _SUBLANES)          # minimal (8,128) boundary only
    n_pad = rows_pad * _LANES

    xf = x.reshape(-1)
    rf = recon_x.reshape(-1)
    if n_pad != n:
        # Minimal zero pad (only when n % 1024 != 0).  Zero padding of BOTH x and
        # recon gives exactly-zero BCE: 0 * clamp(log 0, -100) + 1 * log(1-0) == 0.
        xf = jnp.pad(xf, (0, n_pad - n))
        rf = jnp.pad(rf, (0, n_pad - n))
    x2 = xf.reshape(rows_pad, _LANES)              # native dtype, no up-cast
    r2 = rf.reshape(rows_pad, _LANES)

    tile_rows = min(max_tile_rows, rows_pad)       # both are multiples of 8
    acc_rows = 64 if (tile_rows % 64 == 0) else _SUBLANES
    total_tiles = pl.cdiv(rows_pad, tile_rows)

    if num_splits is None:
        num_splits = _default_num_splits()
    num_splits = max(1, min(int(num_splits), total_tiles))
    tiles_per_split = pl.cdiv(total_tiles, num_splits)
    last_block = total_tiles - 1

    # Clamp the block index so overhang grid steps (when tiles don't divide the
    # split count) never DMA out of bounds; the in-kernel row mask zeroes them.
    img_spec = pl.BlockSpec(
        (tile_rows, _LANES),
        lambda c, i: (jnp.minimum(c * tiles_per_split + i, last_block), 0))
    acc_spec = pl.BlockSpec((None, acc_rows, _LANES), lambda c, i: (c, 0, 0))

    cost = pl.CostEstimate(
        flops=int(6 * n_pad),
        transcendentals=int(2 * n_pad),
        bytes_accessed=int(x2.size * x2.dtype.itemsize
                           + r2.size * r2.dtype.itemsize
                           + num_splits * acc_rows * _LANES * 4),
    )

    bce_parts = pl.pallas_call(
        _make_bce_kernel(tile_rows, acc_rows, tiles_per_split, rows_pad),
        grid=(num_splits, tiles_per_split),
        in_specs=[img_spec, img_spec],
        out_specs=acc_spec,
        out_shape=jax.ShapeDtypeStruct((num_splits, acc_rows, _LANES), jnp.float32),
        compiler_params=pltpu.CompilerParams(
            dimension_semantics=("parallel", "arbitrary"),
            vmem_limit_bytes=32 * 1024 * 1024,
        ),
        cost_estimate=cost,
    )(x2, r2)

    bce = -jnp.sum(bce_parts)
    # kl_coef applied outside the kernel: annealing it never recompiles.
    return bce + kl_coef * kl


def _reference(x, recon_x, mu, logvar, kl_coef=0.01):
    xf = x.astype(jnp.float32)
    pf = recon_x.astype(jnp.float32)
    log_p = jnp.maximum(jnp.log(pf), -100.0)
    log_1mp = jnp.maximum(jnp.log(1.0 - pf), -100.0)
    bce = -jnp.sum(xf * log_p + (1.0 - xf) * log_1mp)
    kl = -0.5 * jnp.sum(1.0 + logvar - mu**2 - jnp.exp(logvar))
    return bce + kl_coef * kl


if __name__ == "__main__":
    key = jax.random.PRNGKey(0)
    ks = jax.random.split(key, 8)

    Z = 32
    mu = jax.random.normal(ks[2], (2, Z), jnp.float32)
    logvar = 0.1 * jax.random.normal(ks[3], (2, Z), jnp.float32)

    def check(x, r, kl_coef, **kw):
        out = jax.block_until_ready(vae_loss(x, r, mu, logvar, kl_coef, **kw))
        ref = _reference(x, r, mu, logvar, kl_coef)
        assert jnp.abs(out - ref) <= 1e-3 * jnp.abs(ref) + 1e-2, (out, ref)

    # Case 1: small lane-aligned NCHW batch, forced through the Pallas path.
    x1 = jax.random.uniform(ks[0], (2, 4, 16, 16), dtype=jnp.float32)            # targets [0,1]
    r1 = jax.nn.sigmoid(jax.random.normal(ks[1], (2, 4, 16, 16), jnp.float32))   # probs (0,1)
    check(x1, r1, 0.01, force_pallas=True)

    # Case 2: non-lane-aligned (MNIST-like) shape -> minimal (8,128) pad path.
    x2 = jax.random.uniform(ks[4], (2, 3, 28, 28), dtype=jnp.float32)
    r2 = jax.nn.sigmoid(jax.random.normal(ks[5], (2, 3, 28, 28), jnp.float32))
    check(x2, r2, 0.5, force_pallas=True)

    # Case 3: larger ragged size -> multi-tile streaming, in-kernel tail mask,
    # and (on multi-TC chips) the 2-way "parallel" split with a clamped tile.
    x3 = jax.random.uniform(ks[6], (7, 1, 443, 443), dtype=jnp.float32)
    r3 = jax.nn.sigmoid(jax.random.normal(ks[7], (7, 1, 443, 443), jnp.float32))
    check(x3, r3, 0.01)

    # Case 4: small-input auto fast path (no pallas_call).
    check(x1, r1, 0.01)

    print("KERNEL_OK")
</pallas_src>

<mosaic_0001>
module attributes {stable_mosaic.version = 11 : i64} {
  func.func @kernel(%arg0: i32, %arg1: i32, %arg2: memref<16x128xf32, #tpu.memory_space<vmem>>, %arg3: memref<16x128xf32, #tpu.memory_space<vmem>>, %arg4: memref<1x8x128xf32, #tpu.memory_space<vmem>>) attributes {dimension_semantics = [#tpu.dimension_semantics<parallel>, #tpu.dimension_semantics<arbitrary>], iteration_bounds = array<i64: 1, 1>, scalar_prefetch = 0 : i64, scratch_operands = 0 : i64, tpu.core_type = #tpu.core_type<tc>, window_params = [{transform_indices = @transform_0, window_bounds = array<i64: 16, 128>}, {transform_indices = @transform_1, window_bounds = array<i64: 16, 128>}, {transform_indices = @transform_2, window_bounds = array<i64: 1, 8, 128>}]} {
    %c0_i32 = arith.constant 0 : i32
    %0 = arith.cmpi eq, %arg1, %c0_i32 : i32
    %1 = arith.extui %0 : i1 to i32
    %c0_i32_0 = arith.constant 0 : i32
    %2 = arith.cmpi ne, %1, %c0_i32_0 : i32
    scf.if %2 {
      %cst_16 = arith.constant 0.000000e+00 : f32
      %38 = vector.broadcast %cst_16 : f32 to vector<8x128xf32>
      %c0_17 = arith.constant 0 : index
      %c0_18 = arith.constant 0 : index
      %c0_19 = arith.constant 0 : index
      %39 = vector.load %arg4[%c0_17, %c0_18, %c0_19] : memref<1x8x128xf32, #tpu.memory_space<vmem>>, vector<1x8x128xf32>
      %40 = vector.shape_cast %39 : vector<1x8x128xf32> to vector<8x128xf32>
      %41 = vector.shape_cast %38 : vector<8x128xf32> to vector<1x8x128xf32>
      tpu.vector_store %arg4[%c0_17, %c0_18, %c0_19], %41 {strides = array<i32>} : memref<1x8x128xf32, #tpu.memory_space<vmem>>, vector<1x8x128xf32>,
    } else {
    }
    %c0 = arith.constant 0 : index
    %c0_1 = arith.constant 0 : index
    %3 = vector.load %arg2[%c0, %c0_1] : memref<16x128xf32, #tpu.memory_space<vmem>>, vector<16x128xf32>
    %c0_2 = arith.constant 0 : index
    %c0_3 = arith.constant 0 : index
    %4 = vector.load %arg3[%c0_2, %c0_3] : memref<16x128xf32, #tpu.memory_space<vmem>>, vector<16x128xf32>
    %5 = math.log %4 : vector<16x128xf32>
    %cst = arith.constant -1.000000e+02 : f32
    %6 = vector.broadcast %cst : f32 to vector<16x128xf32>
    %7 = arith.maximumf %5, %6 : vector<16x128xf32>
    %cst_4 = arith.constant 1.000000e+00 : f32
    %8 = vector.broadcast %cst_4 : f32 to vector<16x128xf32>
    %9 = arith.subf %8, %4 : vector<16x128xf32>
    %10 = math.log %9 : vector<16x128xf32>
    %cst_5 = arith.constant -1.000000e+02 : f32
    %11 = vector.broadcast %cst_5 : f32 to vector<16x128xf32>
    %12 = arith.maximumf %10, %11 : vector<16x128xf32>
    %13 = arith.mulf %3, %7 : vector<16x128xf32>
    %cst_6 = arith.constant 1.000000e+00 : f32
    %14 = vector.broadcast %cst_6 : f32 to vector<16x128xf32>
    %15 = arith.subf %14, %3 : vector<16x128xf32>
    %16 = arith.mulf %15, %12 : vector<16x128xf32>
    %17 = arith.addf %13, %16 : vector<16x128xf32>
    %c1_i32 = arith.constant 1 : i32
    %18 = arith.muli %arg0, %c1_i32 : i32
    %19 = arith.addi %18, %arg1 : i32
    %c16_i32 = arith.constant 16 : i32
    %20 = arith.muli %19, %c16_i32 : i32
    %21 = tpu.iota {dimensions = array<i32: 0>} : vector<16x1xi32>
    %22 = vector.broadcast %20 : i32 to vector<16x1xi32>
    %23 = arith.addi %22, %21 : vector<16x1xi32>
    %c16_i32_7 = arith.constant 16 : i32
    %24 = vector.broadcast %c16_i32_7 : i32 to vector<16x1xi32>
    %25 = arith.cmpi slt, %23, %24 : vector<16x1xi32>
    %cst_8 = arith.constant 0.000000e+00 : f32
    %26 = vector.shape_cast %25 : vector<16x1xi1> to vector<16x1xi1>
    %27 = vector.broadcast %26 : vector<16x1xi1> to vector<16x128xi1>
    %28 = vector.broadcast %cst_8 : f32 to vector<16x128xf32>
    %29 = arith.select %27, %17, %28 : vector<16x128xi1>, vector<16x128xf32>
    %c0_9 = arith.constant 0 : index
    %c0_10 = arith.constant 0 : index
    %c0_11 = arith.constant 0 : index
    %30 = vector.load %arg4[%c0_9, %c0_10, %c0_11] : memref<1x8x128xf32, #tpu.memory_space<vmem>>, vector<1x8x128xf32>
    %31 = vector.shape_cast %30 : vector<1x8x128xf32> to vector<8x128xf32>
    %32 = vector.shape_cast %29 : vector<16x128xf32> to vector<2x8x128xf32>
    %cst_12 = arith.constant dense<0.000000e+00> : vector<8x128xf32>
    %33 = vector.multi_reduction <add>, %32, %cst_12 [0] : vector<2x8x128xf32> to vector<8x128xf32>
    %34 = arith.addf %31, %33 : vector<8x128xf32>
    %c0_13 = arith.constant 0 : index
    %c0_14 = arith.constant 0 : index
    %c0_15 = arith.constant 0 : index
    %35 = vector.load %arg4[%c0_13, %c0_14, %c0_15] : memref<1x8x128xf32, #tpu.memory_space<vmem>>, vector<1x8x128xf32>
    %36 = vector.shape_cast %35 : vector<1x8x128xf32> to vector<8x128xf32>
    %37 = vector.shape_cast %34 : vector<8x128xf32> to vector<1x8x128xf32>
    tpu.vector_store %arg4[%c0_13, %c0_14, %c0_15], %37 {strides = array<i32>} : memref<1x8x128xf32, #tpu.memory_space<vmem>>, vector<1x8x128xf32>,
    return
  }
  func.func @transform_0(%arg0: i32, %arg1: i32) -> (i32, i32) {
    %c1_i32 = arith.constant 1 : i32
    %0 = arith.muli %arg0, %c1_i32 : i32
    %1 = arith.addi %0, %arg1 : i32
    %c0_i32 = arith.constant 0 : i32
    %2 = arith.minsi %1, %c0_i32 : i32
    %c0_i32_0 = arith.constant 0 : i32
    %c0_i32_1 = arith.constant 0 : i32
    return %2, %c0_i32_0 : i32, i32
  }
  func.func @transform_1(%arg0: i32, %arg1: i32) -> (i32, i32) {
    %c1_i32 = arith.constant 1 : i32
    %0 = arith.muli %arg0, %c1_i32 : i32
    %1 = arith.addi %0, %arg1 : i32
    %c0_i32 = arith.constant 0 : i32
    %2 = arith.minsi %1, %c0_i32 : i32
    %c0_i32_0 = arith.constant 0 : i32
    %c0_i32_1 = arith.constant 0 : i32
    return %2, %c0_i32_0 : i32, i32
  }
  func.func @transform_2(%arg0: i32, %arg1: i32) -> (i32, i32, i32) {
    %c0_i32 = arith.constant 0 : i32
    %c0_i32_0 = arith.constant 0 : i32
    %c0_i32_1 = arith.constant 0 : i32
    return %arg0, %c0_i32, %c0_i32_0 : i32, i32, i32
  }
}

</mosaic_0001>

<llo_original>
// kernel: tpu_custom_call.1
$region0: #{tpu_custom_call.1}
  #allocation0 [shape = 'u32[]', space=smem, size = 0x4, offset = 0x4, fixed_abs, tag = 'smem constant byte address 0x4 - core index']
  #allocation1 [shape = 'u32[144,128]{1,0:T(1,128)}', space=vmem, size = 0x12000, scoped, tag = 'internal scratch']
  %s0 = inlined_call_operand.hbm [shape: f32[16,128], index: 0, kind: input, shape index: {}]
  %s1 = inlined_call_operand.hbm [shape: f32[16,128], index: 1, kind: input, shape index: {}]
  %s2 = inlined_call_operand.hbm [shape: f32[1,8,128], index: 2, kind: output, shape index: {}]
  %s3 = sld [smem:[#allocation0]]
  $region30: #{tpu_custom_call.1} parent=0
    _
  %s5 = ssub.s32 1, %s3
  %s6 = scalar_select 0, %s5, %s3
  $region1: #{tpu_custom_call.1} parent=0
    #allocation2 [shape = 'u8[8192]{0}', space=vmem, size = 0x2000, scoped, tag = 'input window, operand 0, single buffered']
    #allocation3 [shape = 's32[1]{0}', space=sflag, size = 0x4, scoped, tag = 'scoped memory for tpu_custom_call.1']
    #allocation4 [shape = 's32[1]{0}', space=sflag, size = 0x4, scoped, tag = 'scoped memory for tpu_custom_call.1']
    #allocation5 [shape = 'u8[8192]{0}', space=vmem, size = 0x2000, scoped, tag = 'input window, operand 1, single buffered']
    #allocation6 [shape = 's32[1]{0}', space=sflag, size = 0x4, scoped, tag = 'scoped memory for tpu_custom_call.1']
    #allocation7 [shape = 'u8[4096]{0}', space=vmem, size = 0x1000, scoped, tag = 'output window, operand 0, single buffered']
    %7 = vsyncpa [#allocation3], 0
    %8 = vsyncpa [#allocation6], 0
    %9 = vsyncpa [#allocation4], 0
    // Predicated region
    $region2: #{tpu_custom_call.1} parent=1 // pred_check
      _
    $region3: #{tpu_custom_call.1} parent=1 // pred_check_branch
      %11 = sbr.rel (0) target = $region5
    $region4: #{tpu_custom_call.1} parent=1 // pred_region
      %s12 = sadd.s32 0, 0
      %p13 = scmp.lt.s32.totalorder %s12, 0
      %s14 = scalar_select %p13, %s12, 0
      %s15 = smul.u32 2, %s14
      %s17 = ssub.s32 256, 256
      %18 = vsyncadd [#allocation3], %s17
      %s19 = smul.addr %s15, 128
      %s20 = scalar_lea.hbm %s0, %s19
      %s21 = sshll.u32 [#allocation2], 4
      %s22 = int_to_ptr.vmem [resolvable:$true] %s21
      %27 = dma.hbm_to_vmem [thread:$0]  %s20, 256, %s22, [#allocation3], 128, 128, 8
    $region5: #{tpu_custom_call.1} parent=1 // pred_fallthru
      _
    // Predicated region
    $region6: #{tpu_custom_call.1} parent=1 // pred_check
      _
    $region7: #{tpu_custom_call.1} parent=1 // pred_check_branch
      %29 = sbr.rel (0) target = $region9
    $region8: #{tpu_custom_call.1} parent=1 // pred_region
      %s30 = sadd.s32 0, 0
      %p31 = scmp.lt.s32.totalorder %s30, 0
      %s32 = scalar_select %p31, %s30, 0
      %s33 = smul.u32 2, %s32
      %s35 = ssub.s32 256, 256
      %36 = vsyncadd [#allocation6], %s35
      %s37 = smul.addr %s33, 128
      %s38 = scalar_lea.hbm %s1, %s37
      %s39 = sshll.u32 [#allocation5], 4
      %s40 = int_to_ptr.vmem [resolvable:$true] %s39
      %45 = dma.hbm_to_vmem [thread:$0]  %s38, 256, %s40, [#allocation6], 128, 128, 8
    $region9: #{tpu_custom_call.1} parent=1 // pred_fallthru
      _
    // Predicated region
    $region10: #{tpu_custom_call.1} parent=1 // pred_check
      _
    $region11: #{tpu_custom_call.1} parent=1 // pred_check_branch
      %47 = sbr.rel (0) target = $region13
    $region12: #{tpu_custom_call.1} parent=1 // pred_region
      %48 = dma.done [#allocation3], 256
    $region13: #{tpu_custom_call.1} parent=1 // pred_fallthru
      _
    // Predicated region
    $region14: #{tpu_custom_call.1} parent=1 // pred_check
      _
    $region15: #{tpu_custom_call.1} parent=1 // pred_check_branch
      %50 = sbr.rel (0) target = $region17
    $region16: #{tpu_custom_call.1} parent=1 // pred_region
      %51 = dma.done [#allocation6], 256
    $region17: #{tpu_custom_call.1} parent=1 // pred_fallthru
      _
    %s52 = sadd.s32 0, 0
    %p53 = scmp.lt.s32.totalorder %s52, 0
    %s54 = scalar_select %p53, %s52, 0
    %s55 = smul.u32 2, %s54
    %s56 = sadd.s32 0, 0
    %p57 = scmp.lt.s32.totalorder %s56, 0
    %s58 = scalar_select %p57, %s56, 0
    %s59 = smul.u32 2, %s58
    %p60 = scmp.eq.s32.totalorder 0, 0
    // Predicated region
    $region18: #{tpu_custom_call.1} parent=1 // pred_check
      %p61 = pneg %p60
    $region19: #{tpu_custom_call.1} parent=1 // pred_check_branch
      %63 = sbr.rel (%p61) target = $region21
    $region20: #{tpu_custom_call.1} parent=1 // pred_region
      %64 = vst [vmem:[#allocation7] sm:$0xff] 0.0
    $region21: #{tpu_custom_call.1} parent=1 // pred_fallthru
      _
    %v65 = vld [vmem:[#allocation2] sm:$0xff]
    %v66 = vld [vmem:[#allocation2 + $0x8] sm:$0xff]
    %v67 = vld [vmem:[#allocation5] sm:$0xff]
    %v68 = vld [vmem:[#allocation5 + $0x8] sm:$0xff]
    %v69 = vlog2.pop %v67
    %v70 = vmul.f32 %v69, 0.6931472
    %v71 = vlog2.pop %v68
    %v72 = vmul.f32 %v71, 0.6931472
    %v73 = vmax.f32 %v70, -100.0
    %v74 = vmax.f32 %v72, -100.0
    %v75 = vsub.f32 1.0, %v67
    %v76 = vsub.f32 1.0, %v68
    %v77 = vlog2.pop %v75
    %v78 = vmul.f32 %v77, 0.6931472
    %v79 = vlog2.pop %v76
    %v80 = vmul.f32 %v79, 0.6931472
    %v81 = vmax.f32 %v78, -100.0
    %v82 = vmax.f32 %v80, -100.0
    %v83 = vmul.f32 %v65, %v73
    %v84 = vmul.f32 %v66, %v74
    %v85 = vsub.f32 1.0, %v65
    %v86 = vsub.f32 1.0, %v66
    %v87 = vmul.f32 %v85, %v81
    %v88 = vmul.f32 %v86, %v82
    %v89 = vadd.f32 %v83, %v87
    %v90 = vadd.f32 %v84, %v88
    %s91 = sadd.s32 0, 0
    %s92 = smul.u32 %s91, 16
    %v93 = vlaneseq
    %v94 = vshrl.u32 %v93, 7
    %v95 = vadd.s32 %v94, 8
    %v96 = vstv %s92
    %v97 = vadd.s32 %v96, %v94
    %v98 = vadd.s32 %v96, %v95
    %vm99 = vcmp.lt.s32.totalorder %v97, 16
    %vm100 = vcmp.lt.s32.totalorder %v98, 16
    %v101 = vsel %vm99, 1, 0
    %v102 = vsel %vm100, 1, 0
    %vm103 = vcmp.eq.s32.totalorder %v101, 1
    %vm104 = vcmp.eq.s32.totalorder %v102, 1
    %v105 = vsel %vm103, %v89, 0.0
    %v106 = vsel %vm104, %v90, 0.0
    %v107 = vld [vmem:[#allocation7] sm:$0xff]
    %v108 = vadd.f32 %v105, %v106
    %v109 = vadd.f32 %v107, %v108
    %110 = vst [vmem:[#allocation7] sm:$0xff] %v109
    // Predicated region
    $region22: #{tpu_custom_call.1} parent=1 // pred_check
      _
    $region23: #{tpu_custom_call.1} parent=1 // pred_check_branch
      %112 = sbr.rel (0) target = $region25
    $region24: #{tpu_custom_call.1} parent=1 // pred_region
      %s114 = ssub.s32 128, 128
      %115 = vsyncadd [#allocation4], %s114
      %s117 = sshll.u32 [#allocation7], 4
      %s118 = int_to_ptr.vmem [resolvable:$true] %s117
      %120 = dma.vmem_to_hbm [thread:$0]  %s118, 128, %s2, [#allocation4]
    $region25: #{tpu_custom_call.1} parent=1 // pred_fallthru
      _
    // Predicated region
    $region26: #{tpu_custom_call.1} parent=1 // pred_check
      _
    $region27: #{tpu_custom_call.1} parent=1 // pred_check_branch
      %122 = sbr.rel (0) target = $region29
    $region28: #{tpu_custom_call.1} parent=1 // pred_region
      %123 = dma.done [#allocation4], 128
    $region29: #{tpu_custom_call.1} parent=1 // pred_fallthru
      _
    %124 = vsyncpa [#allocation3], 1
    %125 = vsyncpa [#allocation6], 1
    %126 = vsyncpa [#allocation4], 1

</llo_original>
